<compile_context>
chip_gen: v7x
topology: tpu7x:2x2x1
jax: 0.10.0
libtpu: 0.0.40
codegen_flags: <defaults>
</compile_context>

<pallas_src>
import jax
import jax.numpy as jnp
from jax.experimental import pallas as pl
from jax.experimental.pallas import tpu as pltpu

LANE = 128            # vreg lane width / pad target for every feature dim
MAX_EDGE_TILE = 512   # edge-row tile upper bound (per-step overhead amortization)


def _round_up(x, m):
    return ((x + m - 1) // m) * m


def _pad2d(x, rows, cols):
    return jnp.pad(x, ((0, rows - x.shape[0]), (0, cols - x.shape[1])))


def _pad_and_tile(n, max_tile):
    # Pad n to a multiple of 128 and pick the largest tile (<= max_tile) that
    # divides the padded size, to minimize grid steps without over-padding.
    npad = _round_up(n, LANE)
    tile = LANE
    for t in (256, 384, 512):
        if t <= max_tile and t <= npad and npad % t == 0:
            tile = t
    return npad, tile


def _vmem_limit_bytes():
    # Per-generation VMEM budget: ~75% of physical (64 MiB on v7x, 128 MiB on
    # v5e/v6e), clamped to a safe range. Falls back to a v7x-safe 48 MiB.
    try:
        cap = pltpu.get_tpu_info().vmem_capacity_bytes
        budget = int(0.75 * cap)
    except Exception:
        budget = 48 * 1024 * 1024
    return max(32 * 1024 * 1024, min(budget, 96 * 1024 * 1024))


# ---------------------------------------------------------------------------
# Pallas kernels
# ---------------------------------------------------------------------------

def gcn_stack_kernel(h0_ref, a_ref, w_ref, b_ref, o_ref, h_scr):
    # One grid step per GraphConv layer. H stays VMEM-resident across layers
    # in h_scr (no HBM round trip). Each layer computes
    #   H' = relu( (A_hat @ H) @ W + b )
    # which is algebraically identical to A_hat @ (H @ W) but needs no XW
    # buffer (no redundant HBM stream, no second kernel launch).
    # Dropout between layers is identity at inference (eval mode).
    layer = pl.program_id(0)

    @pl.when(layer == 0)
    def _():
        h_scr[...] = h0_ref[...]                     # load initial features once

    h_prev = h_scr[...]                              # (npad, F) f32, VMEM
    ah = jnp.dot(a_ref[...], h_prev, preferred_element_type=jnp.float32)
    h_new = jnp.maximum(
        jnp.dot(ah, w_ref[0], preferred_element_type=jnp.float32) + b_ref[0],
        0.0)
    h_scr[...] = h_new                               # stays on-chip for next layer
    o_ref[...] = h_new.astype(o_ref.dtype)           # final layer's write wins


def edge_mlp_kernel(hs_ref, hd_ref, w1s_ref, w1d_ref, b1_ref, w2_ref, b2_ref, o_ref):
    # out = 20 * sigmoid( relu(h_src@W1s + h_dst@W1d + b1) @ W2 + b2 ) - 10
    # (split-weight form of concat([h_src, h_dst]) @ W1; hid kept in f32).
    hid = jnp.dot(hs_ref[...], w1s_ref[...], preferred_element_type=jnp.float32)
    hid += jnp.dot(hd_ref[...], w1d_ref[...], preferred_element_type=jnp.float32)
    hid = jnp.maximum(hid + b1_ref[...], 0.0)
    logits = jnp.dot(hid, w2_ref[...], preferred_element_type=jnp.float32) + b2_ref[...]
    o_ref[...] = 20.0 * jax.nn.sigmoid(logits) - 10.0    # lane-dense (te, 128) store


# ---------------------------------------------------------------------------
# pallas_call wrappers
# ---------------------------------------------------------------------------

def gcn_stack(h0, a_hat, w_stack, b_stack, vmem_limit):
    npad, f = h0.shape
    n_layers = w_stack.shape[0]

    # Resident footprint check (x2 for the default double-buffering of the
    # constant-index inputs). TODO(synk): row-tiled streaming fallback.
    resident = (a_hat.size * a_hat.dtype.itemsize + h0.size * 4
                + npad * f * 4            # output buffer
                + npad * f * 4            # H scratch
                + f * f * 2 + f * 4)      # per-layer W/b blocks
    assert 2 * resident < vmem_limit, (
        "graph too large for the fused VMEM-resident path; "
        "needs the row-tiled / block-sparse variant (see TODO)")

    cost = pl.CostEstimate(
        flops=2 * n_layers * (npad * npad * f + npad * f * f),
        transcendentals=0,
        bytes_accessed=(a_hat.size * a_hat.dtype.itemsize
                        + h0.size * 4 + w_stack.size * 2
                        + b_stack.size * 4 + npad * f * 4))

    return pl.pallas_call(
        gcn_stack_kernel,
        out_shape=jax.ShapeDtypeStruct((npad, f), jnp.float32),
        grid=(n_layers,),
        in_specs=[
            pl.BlockSpec((npad, f), lambda l: (0, 0)),      # h0: VMEM-resident
            pl.BlockSpec((npad, npad), lambda l: (0, 0)),   # A_hat: VMEM-resident
            pl.BlockSpec((1, f, f), lambda l: (l, 0, 0)),   # W of layer l
            pl.BlockSpec((1, 1, f), lambda l: (l, 0, 0)),   # b of layer l
        ],
        out_specs=pl.BlockSpec((npad, f), lambda l: (0, 0)),
        scratch_shapes=[pltpu.VMEM((npad, f), jnp.float32)],
        compiler_params=pltpu.CompilerParams(
            dimension_semantics=("arbitrary",),             # layers are sequential
            vmem_limit_bytes=vmem_limit),
        cost_estimate=cost,
    )(h0, a_hat, w_stack, b_stack)


def edge_mlp(h_src, h_dst, w1s, w1d, b1, w2, b2, te, vmem_limit):
    epad, f = h_src.shape
    mlph = w1s.shape[1]
    return pl.pallas_call(
        edge_mlp_kernel,
        out_shape=jax.ShapeDtypeStruct((epad, LANE), jnp.float32),
        grid=(epad // te,),
        in_specs=[pl.BlockSpec((te, f), lambda i: (i, 0)),
                  pl.BlockSpec((te, f), lambda i: (i, 0)),
                  pl.BlockSpec((f, mlph), lambda i: (0, 0)),
                  pl.BlockSpec((f, mlph), lambda i: (0, 0)),
                  pl.BlockSpec((1, mlph), lambda i: (0, 0)),
                  pl.BlockSpec((mlph, LANE), lambda i: (0, 0)),
                  pl.BlockSpec((1, LANE), lambda i: (0, 0))],
        out_specs=pl.BlockSpec((te, LANE), lambda i: (i, 0)),
        compiler_params=pltpu.CompilerParams(
            dimension_semantics=("parallel",),
            vmem_limit_bytes=vmem_limit),
    )(h_src, h_dst, w1s, w1d, b1, w2, b2)


# ---------------------------------------------------------------------------
# Parameter construction + padding to lane-aligned layouts
# ---------------------------------------------------------------------------

def init_params(key, embedding_vocab, in_feats, n_hidden, mlp_hidden, n_layers):
    keys = jax.random.split(key, 4 + 2 * n_layers)
    params = {}
    params["emb"] = jax.random.normal(keys[0], (embedding_vocab, in_feats),
                                      jnp.float32) * 0.1
    gcn = []
    dims = [in_feats] + [n_hidden] * n_layers
    for i in range(n_layers):
        w = jax.random.normal(keys[1 + 2 * i], (dims[i], dims[i + 1]),
                              jnp.float32) * 0.1
        b = jax.random.normal(keys[2 + 2 * i], (dims[i + 1],), jnp.float32) * 0.01
        gcn.append((w, b))
    params["gcn"] = gcn
    params["w1"] = jax.random.normal(keys[-2], (2 * n_hidden, mlp_hidden),
                                     jnp.float32) * 0.1
    params["b1"] = jnp.zeros((mlp_hidden,), jnp.float32)
    params["w2"] = jax.random.normal(keys[-1], (mlp_hidden, 1), jnp.float32) * 0.1
    params["b2"] = jnp.zeros((1,), jnp.float32)
    return params


def pad_params(params):
    # Zero-pad every feature dim to LANE so padded lanes stay exactly 0 through
    # matmuls and ReLU (they never leak into real outputs). Weights are stacked
    # per layer so the fused stack kernel can index them by layer id.
    f = LANE
    emb = params["emb"]
    padded = {"emb": _pad2d(emb, emb.shape[0], f).astype(jnp.float32)}

    w_stack = jnp.stack([_pad2d(w, f, f) for w, _ in params["gcn"]])
    b_stack = jnp.stack([jnp.pad(b, (0, f - b.shape[0])).reshape(1, f)
                         for _, b in params["gcn"]])
    padded["w_stack"] = w_stack.astype(jnp.bfloat16)        # (L, 128, 128)
    padded["b_stack"] = b_stack.astype(jnp.float32)         # (L, 1, 128)

    w1 = params["w1"]                                        # [2*n_hidden, mlp_hidden]
    n_hidden = w1.shape[0] // 2
    mlph_pad = _round_up(w1.shape[1], LANE)
    padded["w1s"] = _pad2d(w1[:n_hidden], f, mlph_pad).astype(jnp.bfloat16)
    padded["w1d"] = _pad2d(w1[n_hidden:], f, mlph_pad).astype(jnp.bfloat16)
    padded["b1"] = jnp.pad(params["b1"], (0, mlph_pad - params["b1"].shape[0])
                           ).reshape(1, mlph_pad).astype(jnp.float32)
    padded["w2"] = _pad2d(params["w2"], mlph_pad, LANE).astype(jnp.bfloat16)
    padded["b2"] = jnp.pad(params["b2"], (0, LANE - params["b2"].shape[0])
                           ).reshape(1, LANE).astype(jnp.float32)
    return padded


def build_graph(key, n_nodes, n_edges):
    k_src, k_dst = jax.random.split(key)
    src = jax.random.randint(k_src, (n_edges,), 0, n_nodes, dtype=jnp.int32)
    dst = jax.random.randint(k_dst, (n_edges,), 0, n_nodes, dtype=jnp.int32)
    # Dense adjacency: A[i, j] = #edges j -> i  (row = dst, col = src)
    a = jnp.zeros((n_nodes, n_nodes), jnp.float32).at[dst, src].add(1.0)
    # DGL GraphConv norm='both': A_hat = D_in^{-1/2} A D_out^{-1/2} (deg clamped >= 1)
    deg_in = jnp.maximum(a.sum(axis=1), 1.0)
    deg_out = jnp.maximum(a.sum(axis=0), 1.0)
    a_hat = (deg_in ** -0.5)[:, None] * a * (deg_out ** -0.5)[None, :]
    return a_hat, src, dst


# ---------------------------------------------------------------------------
# Forward passes
# ---------------------------------------------------------------------------

def gcn_forward_pallas(padded, a_hat_padded, features, src_ids, dst_ids, n, e,
                       vmem_limit):
    npad = a_hat_padded.shape[0]
    # Embedding lookup: plain-JAX gather (glue), padded rows to the grid size.
    h0 = padded["emb"][features]                              # [n, 128] f32
    h0 = jnp.pad(h0, ((0, npad - n), (0, 0)))                 # [npad, 128]

    # All GraphConv layers in one fused pallas_call (H never leaves VMEM).
    h = gcn_stack(h0, a_hat_padded, padded["w_stack"], padded["b_stack"],
                  vmem_limit)                                 # [npad, 128] f32

    # Edge endpoint features: pad the id vectors first so only one gather per
    # endpoint is materialized (no separate pad copies). TODO(synk): in-kernel.
    epad, te = _pad_and_tile(e, MAX_EDGE_TILE)
    src_pad = jnp.pad(src_ids, (0, epad - e))
    dst_pad = jnp.pad(dst_ids, (0, epad - e))
    h_src = h[src_pad]                                        # [epad, 128] f32
    h_dst = h[dst_pad]

    out_padded = edge_mlp(h_src, h_dst, padded["w1s"], padded["w1d"],
                          padded["b1"], padded["w2"], padded["b2"],
                          te, vmem_limit)                     # [epad, 128]
    return out_padded[:e, :1]                                 # real column / real edges


def gcn_forward_reference(params, features, a_hat, src_ids, dst_ids):
    # Pure-JAX f32 reference (mirrors the PyTorch forward) for validation.
    h = params["emb"][features]
    for w, b in params["gcn"]:
        h = jnp.maximum(a_hat @ (h @ w) + b, 0.0)
    ef = jnp.concatenate([h[src_ids], h[dst_ids]], axis=1)
    hid = jnp.maximum(ef @ params["w1"] + params["b1"], 0.0)
    logits = hid @ params["w2"] + params["b2"]
    return 20.0 * jax.nn.sigmoid(logits) - 10.0


# ---------------------------------------------------------------------------
# Main
# ---------------------------------------------------------------------------

if __name__ == "__main__":
    embedding_vocab = 32
    in_feats = 16
    n_hidden = 32
    mlp_hidden = 32
    n_layers = 2
    n_nodes = 200          # pads to 256
    n_edges = 300          # pads to 384 (single 384-row edge tile)

    root = jax.random.PRNGKey(0)
    k_params, k_graph, k_feat = jax.random.split(root, 3)

    params = init_params(k_params, embedding_vocab, in_feats, n_hidden,
                         mlp_hidden, n_layers)
    a_hat, src_ids, dst_ids = build_graph(k_graph, n_nodes, n_edges)
    features = jax.random.randint(k_feat, (n_nodes,), 0, embedding_vocab,
                                  dtype=jnp.int32)

    # Padded versions for the kernel path. A_hat stays f32 (VMEM-resident here,
    # so no streaming penalty; avoids bf16 rounding of the D^{-1/2} coeffs).
    padded = pad_params(params)
    npad = _round_up(n_nodes, LANE)
    a_hat_padded = jnp.pad(a_hat, ((0, npad - n_nodes),
                                   (0, npad - n_nodes))).astype(jnp.float32)

    vmem_limit = _vmem_limit_bytes()

    out = gcn_forward_pallas(padded, a_hat_padded, features, src_ids, dst_ids,
                             n_nodes, n_edges, vmem_limit)
    out = jax.block_until_ready(out)

    ref = gcn_forward_reference(params, features, a_hat, src_ids, dst_ids)
    ref = jax.block_until_ready(ref)

    assert out.shape == (n_edges, 1)
    assert bool(jnp.all(jnp.isfinite(out)))
    assert bool(jnp.all(out >= -10.0)) and bool(jnp.all(out <= 10.0))
    max_err = float(jnp.max(jnp.abs(out - ref)))
    assert max_err < 5e-2, f"pallas vs f32 reference mismatch: {max_err}"

    print("KERNEL_OK")
</pallas_src>

<mosaic_0001>
module attributes {stable_mosaic.version = 11 : i64} {
  func.func @gcn_stack_kernel(%arg0: i32, %arg1: memref<256x128xf32, #tpu.memory_space<vmem>>, %arg2: memref<256x256xf32, #tpu.memory_space<vmem>>, %arg3: memref<1x128x128xbf16, #tpu.memory_space<vmem>>, %arg4: memref<1x1x128xf32, #tpu.memory_space<vmem>>, %arg5: memref<256x128xf32, #tpu.memory_space<vmem>>, %arg6: memref<256x128xf32, #tpu.memory_space<vmem>>) attributes {dimension_semantics = [#tpu.dimension_semantics<arbitrary>], iteration_bounds = array<i64: 2>, scalar_prefetch = 0 : i64, scratch_operands = 1 : i64, tpu.core_type = #tpu.core_type<tc>, window_params = [{pipeline_mode = #tpu.pipeline_mode<synchronous>, transform_indices = @transform_0, window_bounds = array<i64: 256, 128>}, {pipeline_mode = #tpu.pipeline_mode<synchronous>, transform_indices = @transform_1, window_bounds = array<i64: 256, 256>}, {transform_indices = @transform_2, window_bounds = array<i64: 1, 128, 128>}, {transform_indices = @transform_3, window_bounds = array<i64: 1, 1, 128>}, {pipeline_mode = #tpu.pipeline_mode<synchronous>, transform_indices = @transform_4, window_bounds = array<i64: 256, 128>}]} {
    %c0_i32 = arith.constant 0 : i32
    %0 = arith.cmpi eq, %arg0, %c0_i32 : i32
    %1 = arith.extui %0 : i1 to i32
    %c0_i32_0 = arith.constant 0 : i32
    %2 = arith.cmpi ne, %1, %c0_i32_0 : i32
    scf.if %2 {
      %c0_16 = arith.constant 0 : index
      %c0_17 = arith.constant 0 : index
      %17 = vector.load %arg1[%c0_16, %c0_17] : memref<256x128xf32, #tpu.memory_space<vmem>>, vector<256x128xf32>
      %c0_18 = arith.constant 0 : index
      %c0_19 = arith.constant 0 : index
      %18 = vector.load %arg6[%c0_18, %c0_19] : memref<256x128xf32, #tpu.memory_space<vmem>>, vector<256x128xf32>
      tpu.vector_store %arg6[%c0_18, %c0_19], %17 {strides = array<i32>} : memref<256x128xf32, #tpu.memory_space<vmem>>, vector<256x128xf32>,
    } else {
    }
    %c0 = arith.constant 0 : index
    %c0_1 = arith.constant 0 : index
    %3 = vector.load %arg6[%c0, %c0_1] : memref<256x128xf32, #tpu.memory_space<vmem>>, vector<256x128xf32>
    %c0_2 = arith.constant 0 : index
    %c0_3 = arith.constant 0 : index
    %4 = vector.load %arg2[%c0_2, %c0_3] : memref<256x256xf32, #tpu.memory_space<vmem>>, vector<256x256xf32>
    %cst = arith.constant dense<0.000000e+00> : vector<256x128xf32>
    %5 = tpu.matmul %4, %3, %cst {dimension_numbers = #tpu.dot_dimension_numbers<[1], [0], [0], [1], [0, 0, 1, 1], [], []>} : vector<256x256xf32>, vector<256x128xf32>, vector<256x128xf32> -> vector<256x128xf32>
    %c0_4 = arith.constant 0 : index
    %c0_5 = arith.constant 0 : index
    %c0_6 = arith.constant 0 : index
    %6 = vector.load %arg3[%c0_4, %c0_5, %c0_6] : memref<1x128x128xbf16, #tpu.memory_space<vmem>>, vector<1x128x128xbf16>
    %7 = vector.shape_cast %6 : vector<1x128x128xbf16> to vector<128x128xbf16>
    %cst_7 = arith.constant dense<0.000000e+00> : vector<256x128xf32>
    %8 = tpu.matmul %5, %7, %cst_7 {dimension_numbers = #tpu.dot_dimension_numbers<[1], [0], [0], [1], [0, 0, 1, 1], [], []>} : vector<256x128xf32>, vector<128x128xbf16>, vector<256x128xf32> -> vector<256x128xf32>
    %c0_8 = arith.constant 0 : index
    %c0_9 = arith.constant 0 : index
    %c0_10 = arith.constant 0 : index
    %9 = vector.load %arg4[%c0_8, %c0_9, %c0_10] : memref<1x1x128xf32, #tpu.memory_space<vmem>>, vector<1x1x128xf32>
    %10 = vector.shape_cast %9 : vector<1x1x128xf32> to vector<1x128xf32>
    %11 = vector.broadcast %10 : vector<1x128xf32> to vector<256x128xf32>
    %12 = arith.addf %8, %11 : vector<256x128xf32>
    %cst_11 = arith.constant 0.000000e+00 : f32
    %13 = vector.broadcast %cst_11 : f32 to vector<256x128xf32>
    %14 = arith.maximumf %12, %13 : vector<256x128xf32>
    %c0_12 = arith.constant 0 : index
    %c0_13 = arith.constant 0 : index
    %15 = vector.load %arg6[%c0_12, %c0_13] : memref<256x128xf32, #tpu.memory_space<vmem>>, vector<256x128xf32>
    tpu.vector_store %arg6[%c0_12, %c0_13], %14 {strides = array<i32>} : memref<256x128xf32, #tpu.memory_space<vmem>>, vector<256x128xf32>,
    %c0_14 = arith.constant 0 : index
    %c0_15 = arith.constant 0 : index
    %16 = vector.load %arg5[%c0_14, %c0_15] : memref<256x128xf32, #tpu.memory_space<vmem>>, vector<256x128xf32>
    tpu.vector_store %arg5[%c0_14, %c0_15], %14 {strides = array<i32>} : memref<256x128xf32, #tpu.memory_space<vmem>>, vector<256x128xf32>,
    return
  }
  func.func @transform_0(%arg0: i32) -> (i32, i32) {
    %c0_i32 = arith.constant 0 : i32
    %c0_i32_0 = arith.constant 0 : i32
    %c0_i32_1 = arith.constant 0 : i32
    return %c0_i32, %c0_i32_0 : i32, i32
  }
  func.func @transform_1(%arg0: i32) -> (i32, i32) {
    %c0_i32 = arith.constant 0 : i32
    %c0_i32_0 = arith.constant 0 : i32
    %c0_i32_1 = arith.constant 0 : i32
    return %c0_i32, %c0_i32_0 : i32, i32
  }
  func.func @transform_2(%arg0: i32) -> (i32, i32, i32) {
    %c0_i32 = arith.constant 0 : i32
    %c0_i32_0 = arith.constant 0 : i32
    %c0_i32_1 = arith.constant 0 : i32
    return %arg0, %c0_i32, %c0_i32_0 : i32, i32, i32
  }
  func.func @transform_3(%arg0: i32) -> (i32, i32, i32) {
    %c0_i32 = arith.constant 0 : i32
    %c0_i32_0 = arith.constant 0 : i32
    %c0_i32_1 = arith.constant 0 : i32
    return %arg0, %c0_i32, %c0_i32_0 : i32, i32, i32
  }
  func.func @transform_4(%arg0: i32) -> (i32, i32) {
    %c0_i32 = arith.constant 0 : i32
    %c0_i32_0 = arith.constant 0 : i32
    %c0_i32_1 = arith.constant 0 : i32
    return %c0_i32, %c0_i32_0 : i32, i32
  }
}

</mosaic_0001>

<llo_original>
// kernel: tpu_custom_call.1
$region0: #{tpu_custom_call.1}
  #allocation0 [shape = 'u32[]', space=smem, size = 0x4, offset = 0x4, fixed_abs, tag = 'smem constant byte address 0x4 - core index']
  #allocation1 [shape = 'u32[144,128]{1,0:T(1,128)}', space=vmem, size = 0x12000, scoped, tag = 'internal scratch']
  #allocation2 [shape = 'f32[256,128]{1,0:T(8,128)}', space=vmem, size = 0x20000, scoped, tag = 'scratch operand']
  %s0 = inlined_call_operand.hbm [shape: f32[256,128], index: 0, kind: input, shape index: {}]
  %s1 = inlined_call_operand.hbm [shape: f32[256,256], index: 1, kind: input, shape index: {}]
  %s2 = inlined_call_operand.hbm [shape: bf16[2,128,128], index: 2, kind: input, shape index: {}]
  %s3 = inlined_call_operand.vmem [shape: f32[2,1,128], index: 3, kind: input, shape index: {}]
  %s4 = inlined_call_operand.hbm [shape: f32[256,128], index: 4, kind: output, shape index: {}]
  %s5 = sld [smem:[#allocation0]]
  $region65: #{tpu_custom_call.1} parent=0
    _
  %s7 = ssub.s32 1, %s5
  %s8 = scalar_select 0, %s7, %s5
  $region1: #{tpu_custom_call.1} parent=0
    #allocation3 [shape = 'u8[131072]{0}', space=vmem, size = 0x20000, scoped, tag = 'input window, operand 0, single buffered']
    #allocation4 [shape = 's32[2]{0}', space=sflag, size = 0x8, scoped, tag = 'scoped memory for tpu_custom_call.1']
    #allocation5 [shape = 's32[2]{0}', space=sflag, size = 0x8, scoped, tag = 'scoped memory for tpu_custom_call.1']
    #allocation6 [shape = 'u8[262144]{0}', space=vmem, size = 0x40000, scoped, tag = 'input window, operand 1, single buffered']
    #allocation7 [shape = 's32[1]{0}', space=sflag, size = 0x4, scoped, tag = 'scoped memory for tpu_custom_call.1']
    #allocation8 [shape = 'u8[65536]{0}', space=vmem, size = 0x10000, scoped, tag = 'input window, operand 2']
    #allocation9 [shape = 'u8[131072]{0}', space=vmem, size = 0x20000, scoped, tag = 'output window, operand 0, single buffered']
    %9 = vsyncpa [#allocation4], 0
    %10 = vsyncpa [#allocation7], 0
    %11 = vsyncpa [#allocation5], 0
    loop: start=0, step=1, limit=4
    $region2: #{tpu_custom_call.1} parent=1 // loop_pre_header
      _
    $region3: #{tpu_custom_call.1} parent=1 // loop_header
      %s13 = sphi 0, %s17
      %p14 = scmp.ge.s32.totalorder %s13, 4
      %s21 = sphi 0, %s21
      %s23 = sphi 0, %s21
      %s24 = sphi 0, %s23
      %s38 = sphi 0, %s24
      %s42 = sphi 0, %s42
      %s44 = sphi 0, %s42
      %s45 = sphi 0, %s44
      %s59 = sphi 0, %s45
      %s65 = sphi 0, %s67
      %s68 = sphi 0, %s65
      %s69 = sphi 0, %s68
      %s85 = sphi 0, %s69
      %s91 = sphi 0, %s93
      %s94 = sphi 0, %s91
      %s95 = sphi 0, %s94
      %s111 = sphi 0, %s95
      %s115 = sphi 0, %s115
      %s117 = sphi 0, %s115
      %s118 = sphi 0, %s117
      %s132 = sphi 0, %s118
    $region4: #{tpu_custom_call.1} parent=1 // loop_header_branch
      %16 = sbr.rel (%p14) target = $region8
    $region5: #{tpu_custom_call.1} parent=1 // loop_body
      %s18 = ssub.s32 %s13, 1
      %s19 = ssub.s32 %s13, 2
      %s20 = sadd.s32 %s13, 1
      %s22 = sadd.s32 %s21, 1
      %p25 = scmp.eq.s32.totalorder %s13, 1
      %p26 = scmp.ne.s32.totalorder %s21, %s23
      %p27 = scmp.eq.s32.totalorder %s13, 0
      %p28 = por %p26, %p27
      %p29 = scmp.ne.s32.totalorder %s21, %s23
      %p30 = scmp.eq.s32.totalorder %s18, 1
      %p31 = por %p29, %p30
      %p32 = scmp.ne.s32.totalorder %s23, %s24
      %p33 = scmp.eq.s32.totalorder %s18, 0
      %p34 = por %p32, %p33
      %p35 = scmp.ne.s32.totalorder %s23, %s24
      %p36 = scmp.eq.s32.totalorder %s19, 1
      %p37 = por %p35, %p36
      %p39 = scmp.ne.s32.totalorder %s24, %s38
      %p40 = scmp.eq.s32.totalorder %s19, 0
      %p41 = por %p39, %p40
      %s43 = sadd.s32 %s42, 1
      %p46 = scmp.eq.s32.totalorder %s13, 1
      %p47 = scmp.ne.s32.totalorder %s42, %s44
      %p48 = scmp.eq.s32.totalorder %s13, 0
      %p49 = por %p47, %p48
      %p50 = scmp.ne.s32.totalorder %s42, %s44
      %p51 = scmp.eq.s32.totalorder %s18, 1
      %p52 = por %p50, %p51
      %p53 = scmp.ne.s32.totalorder %s44, %s45
      %p54 = scmp.eq.s32.totalorder %s18, 0
      %p55 = por %p53, %p54
      %p56 = scmp.ne.s32.totalorder %s44, %s45
      %p57 = scmp.eq.s32.totalorder %s19, 1
      %p58 = por %p56, %p57
      %p60 = scmp.ne.s32.totalorder %s45, %s59
      %p61 = scmp.eq.s32.totalorder %s19, 0
      %p62 = por %p60, %p61
      %s63 = ssub.s32 %s13, %s20
      %p64 = scmp.eq.s32.totalorder %s63, 0
      %s66 = sadd.s32 %s65, 1
      %s67 = scalar_select %p64, %s65, %s66
      %p70 = pneg %p64
      %p71 = scmp.eq.s32.totalorder %s13, 1
      %p72 = por %p70, %p71
      %p73 = scmp.ne.s32.totalorder %s65, %s68
      %p74 = scmp.eq.s32.totalorder %s13, 0
      %p75 = por %p73, %p74
      %p76 = scmp.ne.s32.totalorder %s65, %s68
      %p77 = scmp.eq.s32.totalorder %s18, 1
      %p78 = por %p76, %p77
      %p79 = scmp.ne.s32.totalorder %s68, %s69
      %p80 = scmp.eq.s32.totalorder %s18, 0
      %p81 = por %p79, %p80
      %p82 = scmp.ne.s32.totalorder %s68, %s69
      %p83 = scmp.eq.s32.totalorder %s19, 1
      %p84 = por %p82, %p83
      %p86 = scmp.ne.s32.totalorder %s69, %s85
      %p87 = scmp.eq.s32.totalorder %s19, 0
      %p88 = por %p86, %p87
      %s89 = ssub.s32 %s13, %s20
      %p90 = scmp.eq.s32.totalorder %s89, 0
      %s92 = sadd.s32 %s91, 1
      %s93 = scalar_select %p90, %s91, %s92
      %p96 = pneg %p90
      %p97 = scmp.eq.s32.totalorder %s13, 1
      %p98 = por %p96, %p97
      %p99 = scmp.ne.s32.totalorder %s91, %s94
      %p100 = scmp.eq.s32.totalorder %s13, 0
      %p101 = por %p99, %p100
      %p102 = scmp.ne.s32.totalorder %s91, %s94
      %p103 = scmp.eq.s32.totalorder %s18, 1
      %p104 = por %p102, %p103
      %p105 = scmp.ne.s32.totalorder %s94, %s95
      %p106 = scmp.eq.s32.totalorder %s18, 0
      %p107 = por %p105, %p106
      %p108 = scmp.ne.s32.totalorder %s94, %s95
      %p109 = scmp.eq.s32.totalorder %s19, 1
      %p110 = por %p108, %p109
      %p112 = scmp.ne.s32.totalorder %s95, %s111
      %p113 = scmp.eq.s32.totalorder %s19, 0
      %p114 = por %p112, %p113
      %s116 = sadd.s32 %s115, 1
      %p119 = scmp.eq.s32.totalorder %s13, 1
      %p120 = scmp.ne.s32.totalorder %s115, %s117
      %p121 = scmp.eq.s32.totalorder %s13, 0
      %p122 = por %p120, %p121
      %p123 = scmp.ne.s32.totalorder %s115, %s117
      %p124 = scmp.eq.s32.totalorder %s18, 1
      %p125 = por %p123, %p124
      %p126 = scmp.ne.s32.totalorder %s117, %s118
      %p127 = scmp.eq.s32.totalorder %s18, 0
      %p128 = por %p126, %p127
      %p129 = scmp.ne.s32.totalorder %s117, %s118
      %p130 = scmp.eq.s32.totalorder %s19, 1
      %p131 = por %p129, %p130
      %p133 = scmp.ne.s32.totalorder %s118, %s132
      %p134 = scmp.eq.s32.totalorder %s19, 0
      %p135 = por %p133, %p134
      %p136 = scmp.le.s32.totalorder 1, %s13
      %p137 = scmp.lt.s32.totalorder %s13, 3
      %p138 = pnand %p136, %p137
      %p139 = pneg %p138
      // Predicated region
      $region9: #{tpu_custom_call.1} parent=5 // pred_check
        _
      $region10: #{tpu_custom_call.1} parent=5 // pred_check_branch
        %141 = sbr.rel (%p138) target = $region12
      $region11: #{tpu_custom_call.1} parent=5 // pred_region
        %s142 = ssub.s32 %s13, 1
        // Predicated region
        $region13: #{tpu_custom_call.1} parent=11 // pred_check
          %p143 = pneg %p34
        $region14: #{tpu_custom_call.1} parent=11 // pred_check_branch
          %145 = sbr.rel (%p143) target = $region16
        $region15: #{tpu_custom_call.1} parent=11 // pred_region
          %s147 = ssub.s32 4096, 4096
          %148 = vsyncadd [#allocation4], %s147
          %s149 = sshll.u32 [#allocation3], 4
          %s150 = int_to_ptr.vmem [resolvable:$true] %s149
          %155 = dma.hbm_to_vmem [thread:$0]  %s0, 4096, %s150, [#allocation4], 128, 128, 8
        $region16: #{tpu_custom_call.1} parent=11 // pred_fallthru
          _
        // Predicated region
        $region17: #{tpu_custom_call.1} parent=11 // pred_check
          %p156 = pneg %p55
        $region18: #{tpu_custom_call.1} parent=11 // pred_check_branch
          %158 = sbr.rel (%p156) target = $region20
        $region19: #{tpu_custom_call.1} parent=11 // pred_region
          %s160 = ssub.s32 8192, 8192
          %161 = vsyncadd [#allocation7], %s160
          %s162 = sshll.u32 [#allocation6], 4
          %s163 = int_to_ptr.vmem [resolvable:$true] %s162
          %168 = dma.hbm_to_vmem [thread:$0]  %s1, 8192, %s163, [#allocation7], 256, 256, 16
        $region20: #{tpu_custom_call.1} parent=11 // pred_fallthru
          _
      $region12: #{tpu_custom_call.1} parent=5 // pred_fallthru
        _
      %p169 = scmp.lt.s32.totalorder %s13, 2
      // Predicated region
      $region21: #{tpu_custom_call.1} parent=5 // pred_check
        %p170 = pneg %p169
      $region22: #{tpu_custom_call.1} parent=5 // pred_check_branch
        %172 = sbr.rel (%p170) target = $region24
      $region23: #{tpu_custom_call.1} parent=5 // pred_region
        // Predicated region
        $region25: #{tpu_custom_call.1} parent=23 // pred_check
          %p173 = pneg %p75
        $region26: #{tpu_custom_call.1} parent=23 // pred_check_branch
          %175 = sbr.rel (%p173) target = $region28
        $region27: #{tpu_custom_call.1} parent=23 // pred_region
          %s176 = sand.u32 %s13, 1
          %s177 = scalar_lea.sflag [#allocation4], %s176
          %s178 = sand.u32 %s65, 1
          %s179 = smul.addr %s178, 64
          %s180 = scalar_lea.vmem [#allocation8], %s179
          %s182 = ssub.s32 1024, 1024
          %183 = vsyncadd %s177, %s182
          %s184 = smul.addr %s13, 16
          %s185 = smul.addr %s184, 64
          %s186 = scalar_lea.hbm %s2, %s185
          %s187 = sshll.u32 %s180, 4
          %s188 = int_to_ptr.vmem [resolvable:$true] %s187
          %193 = dma.hbm_to_vmem [thread:$0]  %s186, 1024, %s188, %s177, 64, 64, 4
        $region28: #{tpu_custom_call.1} parent=23 // pred_fallthru
          _
        // Predicated region
        $region29: #{tpu_custom_call.1} parent=23 // pred_check
          %p194 = pneg %p101
        $region30: #{tpu_custom_call.1} parent=23 // pred_check_branch
          %196 = sbr.rel (%p194) target = $region32
        $region31: #{tpu_custom_call.1} parent=23 // pred_region
          %p197 = scmp.lt.s32.totalorder %s13, 1
          %s198 = scalar_select %p197, %s13, 1
          %s199 = scalar_lea.vmem %s3, %s198
        $region32: #{tpu_custom_call.1} parent=23 // pred_fallthru
          _
      $region24: #{tpu_custom_call.1} parent=5 // pred_fallthru
        _
      %p200 = scmp.le.s32.totalorder 1, %s13
      %p201 = scmp.lt.s32.totalorder %s13, 3
      %p202 = pnand %p200, %p201
      %p203 = pneg %p202
      // Predicated region
      $region33: #{tpu_custom_call.1} parent=5 // pred_check
        _
      $region34: #{tpu_custom_call.1} parent=5 // pred_check_branch
        %205 = sbr.rel (%p202) target = $region36
      $region35: #{tpu_custom_call.1} parent=5 // pred_region
        %s206 = ssub.s32 %s13, 1
        // Predicated region
        $region37: #{tpu_custom_call.1} parent=35 // pred_check
          %p207 = pneg %p34
        $region38: #{tpu_custom_call.1} parent=35 // pred_check_branch
          %209 = sbr.rel (%p207) target = $region40
        $region39: #{tpu_custom_call.1} parent=35 // pred_region
          %210 = dma.done [#allocation4], 4096
        $region40: #{tpu_custom_call.1} parent=35 // pred_fallthru
          _
        // Predicated region
        $region41: #{tpu_custom_call.1} parent=35 // pred_check
          %p211 = pneg %p55
        $region42: #{tpu_custom_call.1} parent=35 // pred_check_branch
          %213 = sbr.rel (%p211) target = $region44
        $region43: #{tpu_custom_call.1} parent=35 // pred_region
          %214 = dma.done [#allocation7], 8192
        $region44: #{tpu_custom_call.1} parent=35 // pred_fallthru
          _
        %s215 = sand.u32 %s18, 1
        %s216 = scalar_lea.sflag [#allocation4], %s215
        %s217 = sand.u32 %s68, 1
        %s218 = smul.addr %s217, 64
        %s219 = scalar_lea.vmem [#allocation8], %s218
        // Predicated region
        $region45: #{tpu_custom_call.1} parent=35 // pred_check
          %p220 = pneg %p81
        $region46: #{tpu_custom_call.1} parent=35 // pred_check_branch
          %222 = sbr.rel (%p220) target = $region48
        $region47: #{tpu_custom_call.1} parent=35 // pred_region
          %223 = dma.done %s216, 1024
        $region48: #{tpu_custom_call.1} parent=35 // pred_fallthru
          _
        %p224 = pneg %p34
        %p225 = pneg %p31
        %p226 = pneg %p55
        %p227 = pneg %p52
        %s228 = sand.u32 %s18, 1
        %s229 = scalar_lea.sflag [#allocation4], %s228
        %s230 = sand.u32 %s68, 1
        %s231 = smul.addr %s230, 64
        %s232 = scalar_lea.vmem [#allocation8], %s231
        %p233 = pneg %p81
        %p234 = pneg %p78
        %p235 = scmp.lt.s32.totalorder %s18, 1
        %s236 = scalar_select %p235, %s18, 1
        %s237 = scalar_lea.vmem %s3, %s236
        %p238 = pneg %p107
        %p239 = pneg %p104
        %p240 = pneg %p128
        %p241 = pneg %p125
        %p242 = scmp.lt.s32.totalorder %s18, 1
        %s243 = scalar_select %p242, %s18, 1
        %s244 = scalar_lea.vmem %s3, %s243
        %p246 = scmp.eq.s32.totalorder %s18, 0
        // Predicated region
        $region49: #{tpu_custom_call.1} parent=35 // pred_check
          %p247 = pneg %p246
        $region50: #{tpu_custom_call.1} parent=35 // pred_check_branch
          %249 = sbr.rel (%p247) target = $region52
        $region51: #{tpu_custom_call.1} parent=35 // pred_region
          %v250 = vld [vmem:[#allocation3] sm:$0xff]
          %v251 = vld [vmem:[#allocation3 + $0x8] sm:$0xff]
          %v252 = vld [vmem:[#allocation3 + $0x10] sm:$0xff]
          %v253 = vld [vmem:[#allocation3 + $0x18] sm:$0xff]
          %v254 = vld [vmem:[#allocation3 + $0x20] sm:$0xff]
          %v255 = vld [vmem:[#allocation3 + $0x28] sm:$0xff]
          %v256 = vld [vmem:[#allocation3 + $0x30] sm:$0xff]
          %v257 = vld [vmem:[#allocation3 + $0x38] sm:$0xff]
          %v258 = vld [vmem:[#allocation3 + $0x40] sm:$0xff]
          %v259 = vld [vmem:[#allocation3 + $0x48] sm:$0xff]
          %v260 = vld [vmem:[#allocation3 + $0x50] sm:$0xff]
          %v261 = vld [vmem:[#allocation3 + $0x58] sm:$0xff]
          %v262 = vld [vmem:[#allocation3 + $0x60] sm:$0xff]
          %v263 = vld [vmem:[#allocation3 + $0x68] sm:$0xff]
          %v264 = vld [vmem:[#allocation3 + $0x70] sm:$0xff]
          %v265 = vld [vmem:[#allocation3 + $0x78] sm:$0xff]
          %v266 = vld [vmem:[#allocation3 + $0x80] sm:$0xff]
          %v267 = vld [vmem:[#allocation3 + $0x88] sm:$0xff]
          %v268 = vld [vmem:[#allocation3 + $0x90] sm:$0xff]
          %v269 = vld [vmem:[#allocation3 + $0x98] sm:$0xff]
          %v270 = vld [vmem:[#allocation3 + $0xa0] sm:$0xff]
          %v271 = vld [vmem:[#allocation3 + $0xa8] sm:$0xff]
          %v272 = vld [vmem:[#allocation3 + $0xb0] sm:$0xff]
          %v273 = vld [vmem:[#allocation3 + $0xb8] sm:$0xff]
          %v274 = vld [vmem:[#allocation3 + $0xc0] sm:$0xff]
          %v275 = vld [vmem:[#allocation3 + $0xc8] sm:$0xff]
          %v276 = vld [vmem:[#allocation3 + $0xd0] sm:$0xff]
          %v277 = vld [vmem:[#allocation3 + $0xd8] sm:$0xff]
          %v278 = vld [vmem:[#allocation3 + $0xe0] sm:$0xff]
          %v279 = vld [vmem:[#allocation3 + $0xe8] sm:$0xff]
          %v280 = vld [vmem:[#allocation3 + $0xf0] sm:$0xff]
          %v281 = vld [vmem:[#allocation3 + $0xf8] sm:$0xff]
          %282 = vst [vmem:[#allocation2] sm:$0xff] %v250
          %283 = vst [vmem:[#allocation2 + $0x8] sm:$0xff] %v251
          %284 = vst [vmem:[#allocation2 + $0x10] sm:$0xff] %v252
          %285 = vst [vmem:[#allocation2 + $0x18] sm:$0xff] %v253
          %286 = vst [vmem:[#allocation2 + $0x20] sm:$0xff] %v254
          %287 = vst [vmem:[#allocation2 + $0x28] sm:$0xff] %v255
          %288 = vst [vmem:[#allocation2 + $0x30] sm:$0xff] %v256
          %289 = vst [vmem:[#allocation2 + $0x38] sm:$0xff] %v257
          %290 = vst [vmem:[#allocation2 + $0x40] sm:$0xff] %v258
          %291 = vst [vmem:[#allocation2 + $0x48] sm:$0xff] %v259
          %292 = vst [vmem:[#allocation2 + $0x50] sm:$0xff] %v260
          %293 = vst [vmem:[#allocation2 + $0x58] sm:$0xff] %v261
          %294 = vst [vmem:[#allocation2 + $0x60] sm:$0xff] %v262
          %295 = vst [vmem:[#allocation2 + $0x68] sm:$0xff] %v263
          %296 = vst [vmem:[#allocation2 + $0x70] sm:$0xff] %v264
          %297 = vst [vmem:[#allocation2 + $0x78] sm:$0xff] %v265
          %298 = vst [vmem:[#allocation2 + $0x80] sm:$0xff] %v266
          %299 = vst [vmem:[#allocation2 + $0x88] sm:$0xff] %v267
          %300 = vst [vmem:[#allocation2 + $0x90] sm:$0xff] %v268
          %301 = vst [vmem:[#allocation2 + $0x98] sm:$0xff] %v269
          %302 = vst [vmem:[#allocation2 + $0xa0] sm:$0xff] %v270
          %303 = vst [vmem:[#allocation2 + $0xa8] sm:$0xff] %v271
          %304 = vst [vmem:[#allocation2 + $0xb0] sm:$0xff] %v272
          %305 = vst [vmem:[#allocation2 + $0xb8] sm:$0xff] %v273
          %306 = vst [vmem:[#allocation2 + $0xc0] sm:$0xff] %v274
          %307 = vst [vmem:[#allocation2 + $0xc8] sm:$0xff] %v275
          %308 = vst [vmem:[#allocation2 + $0xd0] sm:$0xff] %v276
          %309 = vst [vmem:[#allocation2 + $0xd8] sm:$0xff] %v277
          %310 = vst [vmem:[#allocation2 + $0xe0] sm:$0xff] %v278
          %311 = vst [vmem:[#allocation2 + $0xe8] sm:$0xff] %v279
          %312 = vst [vmem:[#allocation2 + $0xf0] sm:$0xff] %v280
          %313 = vst [vmem:[#allocation2 + $0xf8] sm:$0xff] %v281
        $region52: #{tpu_custom_call.1} parent=35 // pred_fallthru
          _
        %v314 = vld [vmem:[#allocation2] sm:$0xff]
        %v315 = vld [vmem:[#allocation2 + $0x8] sm:$0xff]
        %v316 = vld [vmem:[#allocation2 + $0x10] sm:$0xff]
        %v317 = vld [vmem:[#allocation2 + $0x18] sm:$0xff]
        %v318 = vld [vmem:[#allocation2 + $0x20] sm:$0xff]
        %v319 = vld [vmem:[#allocation2 + $0x28] sm:$0xff]
        %v320 = vld [vmem:[#allocation2 + $0x30] sm:$0xff]
        %v321 = vld [vmem:[#allocation2 + $0x38] sm:$0xff]
        %v322 = vld [vmem:[#allocation2 + $0x40] sm:$0xff]
        %v323 = vld [vmem:[#allocation2 + $0x48] sm:$0xff]
        %v324 = vld [vmem:[#allocation2 + $0x50] sm:$0xff]
        %v325 = vld [vmem:[#allocation2 + $0x58] sm:$0xff]
        %v326 = vld [vmem:[#allocation2 + $0x60] sm:$0xff]
        %v327 = vld [vmem:[#allocation2 + $0x68] sm:$0xff]
        %v328 = vld [vmem:[#allocation2 + $0x70] sm:$0xff]
        %v329 = vld [vmem:[#allocation2 + $0x78] sm:$0xff]
        %v330 = vld [vmem:[#allocation2 + $0x80] sm:$0xff]
        %v331 = vld [vmem:[#allocation2 + $0x88] sm:$0xff]
        %v332 = vld [vmem:[#allocation2 + $0x90] sm:$0xff]
        %v333 = vld [vmem:[#allocation2 + $0x98] sm:$0xff]
        %v334 = vld [vmem:[#allocation2 + $0xa0] sm:$0xff]
        %v335 = vld [vmem:[#allocation2 + $0xa8] sm:$0xff]
        %v336 = vld [vmem:[#allocation2 + $0xb0] sm:$0xff]
        %v337 = vld [vmem:[#allocation2 + $0xb8] sm:$0xff]
        %v338 = vld [vmem:[#allocation2 + $0xc0] sm:$0xff]
        %v339 = vld [vmem:[#allocation2 + $0xc8] sm:$0xff]
        %v340 = vld [vmem:[#allocation2 + $0xd0] sm:$0xff]
        %v341 = vld [vmem:[#allocation2 + $0xd8] sm:$0xff]
        %v342 = vld [vmem:[#allocation2 + $0xe0] sm:$0xff]
        %v343 = vld [vmem:[#allocation2 + $0xe8] sm:$0xff]
        %v344 = vld [vmem:[#allocation2 + $0xf0] sm:$0xff]
        %v345 = vld [vmem:[#allocation2 + $0xf8] sm:$0xff]
        %v346 = vld [vmem:[#allocation6] sm:$0xff]
        %v347 = vld [vmem:[#allocation6 + $0x8] sm:$0xff]
        %v348 = vld [vmem:[#allocation6 + $0x10] sm:$0xff]
        %v349 = vld [vmem:[#allocation6 + $0x18] sm:$0xff]
        %v350 = vld [vmem:[#allocation6 + $0x20] sm:$0xff]
        %v351 = vld [vmem:[#allocation6 + $0x28] sm:$0xff]
        %v352 = vld [vmem:[#allocation6 + $0x30] sm:$0xff]
        %v353 = vld [vmem:[#allocation6 + $0x38] sm:$0xff]
        %v354 = vld [vmem:[#allocation6 + $0x40] sm:$0xff]
        %v355 = vld [vmem:[#allocation6 + $0x48] sm:$0xff]
        %v356 = vld [vmem:[#allocation6 + $0x50] sm:$0xff]
        %v357 = vld [vmem:[#allocation6 + $0x58] sm:$0xff]
        %v358 = vld [vmem:[#allocation6 + $0x60] sm:$0xff]
        %v359 = vld [vmem:[#allocation6 + $0x68] sm:$0xff]
        %v360 = vld [vmem:[#allocation6 + $0x70] sm:$0xff]
        %v361 = vld [vmem:[#allocation6 + $0x78] sm:$0xff]
        %v362 = vld [vmem:[#allocation6 + $0x80] sm:$0xff]
        %v363 = vld [vmem:[#allocation6 + $0x88] sm:$0xff]
        %v364 = vld [vmem:[#allocation6 + $0x90] sm:$0xff]
        %v365 = vld [vmem:[#allocation6 + $0x98] sm:$0xff]
        %v366 = vld [vmem:[#allocation6 + $0xa0] sm:$0xff]
        %v367 = vld [vmem:[#allocation6 + $0xa8] sm:$0xff]
        %v368 = vld [vmem:[#allocation6 + $0xb0] sm:$0xff]
        %v369 = vld [vmem:[#allocation6 + $0xb8] sm:$0xff]
        %v370 = vld [vmem:[#allocation6 + $0xc0] sm:$0xff]
        %v371 = vld [vmem:[#allocation6 + $0xc8] sm:$0xff]
        %v372 = vld [vmem:[#allocation6 + $0xd0] sm:$0xff]
        %v373 = vld [vmem:[#allocation6 + $0xd8] sm:$0xff]
        %v374 = vld [vmem:[#allocation6 + $0xe0] sm:$0xff]
        %v375 = vld [vmem:[#allocation6 + $0xe8] sm:$0xff]
        %v376 = vld [vmem:[#allocation6 + $0xf0] sm:$0xff]
        %v377 = vld [vmem:[#allocation6 + $0xf8] sm:$0xff]
        %v378 = vld [vmem:[#allocation6 + $0x100] sm:$0xff]
        %v379 = vld [vmem:[#allocation6 + $0x108] sm:$0xff]
        %v380 = vld [vmem:[#allocation6 + $0x110] sm:$0xff]
        %v381 = vld [vmem:[#allocation6 + $0x118] sm:$0xff]
        %v382 = vld [vmem:[#allocation6 + $0x120] sm:$0xff]
        %v383 = vld [vmem:[#allocation6 + $0x128] sm:$0xff]
        %v384 = vld [vmem:[#allocation6 + $0x130] sm:$0xff]
        %v385 = vld [vmem:[#allocation6 + $0x138] sm:$0xff]
        %v386 = vld [vmem:[#allocation6 + $0x140] sm:$0xff]
        %v387 = vld [vmem:[#allocation6 + $0x148] sm:$0xff]
        %v388 = vld [vmem:[#allocation6 + $0x150] sm:$0xff]
        %v389 = vld [vmem:[#allocation6 + $0x158] sm:$0xff]
        %v390 = vld [vmem:[#allocation6 + $0x160] sm:$0xff]
        %v391 = vld [vmem:[#allocation6 + $0x168] sm:$0xff]
        %v392 = vld [vmem:[#allocation6 + $0x170] sm:$0xff]
        %v393 = vld [vmem:[#allocation6 + $0x178] sm:$0xff]
        %v394 = vld [vmem:[#allocation6 + $0x180] sm:$0xff]
        %v395 = vld [vmem:[#allocation6 + $0x188] sm:$0xff]
        %v396 = vld [vmem:[#allocation6 + $0x190] sm:$0xff]
        %v397 = vld [vmem:[#allocation6 + $0x198] sm:$0xff]
        %v398 = vld [vmem:[#allocation6 + $0x1a0] sm:$0xff]
        %v399 = vld [vmem:[#allocation6 + $0x1a8] sm:$0xff]
        %v400 = vld [vmem:[#allocation6 + $0x1b0] sm:$0xff]
        %v401 = vld [vmem:[#allocation6 + $0x1b8] sm:$0xff]
        %v402 = vld [vmem:[#allocation6 + $0x1c0] sm:$0xff]
        %v403 = vld [vmem:[#allocation6 + $0x1c8] sm:$0xff]
        %v404 = vld [vmem:[#allocation6 + $0x1d0] sm:$0xff]
        %v405 = vld [vmem:[#allocation6 + $0x1d8] sm:$0xff]
        %v406 = vld [vmem:[#allocation6 + $0x1e0] sm:$0xff]
        %v407 = vld [vmem:[#allocation6 + $0x1e8] sm:$0xff]
        %v408 = vld [vmem:[#allocation6 + $0x1f0] sm:$0xff]
        %v409 = vld [vmem:[#allocation6 + $0x1f8] sm:$0xff]
        %410 = vmatprep.subr.mxu0 0.0
        %411 = vmatpush1.msra.mxu0 %v314
        %412 = vmatprep.subr.mxu0 0.0
        %413 = vmatpush1.msra.mxu0 %v315
        %414 = vmatprep.subr.mxu0 0.0
        %415 = vmatpush1.msra.mxu0 %v316
        %416 = vmatprep.subr.mxu0 0.0
        %417 = vmatpush1.msra.mxu0 %v317
        %418 = vmatprep.subr.mxu0 0.0
        %419 = vmatpush1.msra.mxu0 %v318
        %420 = vmatprep.subr.mxu0 0.0
        %421 = vmatpush1.msra.mxu0 %v319
        %422 = vmatprep.subr.mxu0 0.0
        %423 = vmatpush1.msra.mxu0 %v320
        %424 = vmatprep.subr.mxu0 0.0
        %425 = vmatpush1.msra.mxu0 %v321
        %426 = vmatprep.subr.mxu0 0.0
        %427 = vmatpush1.msra.mxu0 %v322
        %428 = vmatprep.subr.mxu0 0.0
        %429 = vmatpush1.msra.mxu0 %v323
        %430 = vmatprep.subr.mxu0 0.0
        %431 = vmatpush1.msra.mxu0 %v324
        %432 = vmatprep.subr.mxu0 0.0
        %433 = vmatpush1.msra.mxu0 %v325
        %434 = vmatprep.subr.mxu0 0.0
        %435 = vmatpush1.msra.mxu0 %v326
        %436 = vmatprep.subr.mxu0 0.0
        %437 = vmatpush1.msra.mxu0 %v327
        %438 = vmatprep.subr.mxu0 0.0
        %439 = vmatpush1.msra.mxu0 %v328
        %440 = vmatprep.subr.mxu0 0.0
        %441 = vmatpush1.msra.mxu0 %v329
        %442 = vmatprep.subr.mxu0 0.0
        %443 = vmatpush1.msra.mxu0 %v330
        %444 = vmatprep.subr.mxu0 0.0
        %445 = vmatpush1.msra.mxu0 %v331
        %446 = vmatprep.subr.mxu0 0.0
        %447 = vmatpush1.msra.mxu0 %v332
        %448 = vmatprep.subr.mxu0 0.0
        %449 = vmatpush1.msra.mxu0 %v333
        %450 = vmatprep.subr.mxu0 0.0
        %451 = vmatpush1.msra.mxu0 %v334
        %452 = vmatprep.subr.mxu0 0.0
        %453 = vmatpush1.msra.mxu0 %v335
        %454 = vmatprep.subr.mxu0 0.0
        %455 = vmatpush1.msra.mxu0 %v336
        %456 = vmatprep.subr.mxu0 0.0
        %457 = vmatpush1.msra.mxu0 %v337
        %458 = vmatprep.subr.mxu0 0.0
        %459 = vmatpush1.msra.mxu0 %v338
        %460 = vmatprep.subr.mxu0 0.0
        %461 = vmatpush1.msra.mxu0 %v339
        %462 = vmatprep.subr.mxu0 0.0
        %463 = vmatpush1.msra.mxu0 %v340
        %464 = vmatprep.subr.mxu0 0.0
        %465 = vmatpush1.msra.mxu0 %v341
        %466 = vmatprep.subr.mxu0 0.0
        %467 = vmatpush1.msra.mxu0 %v342
        %468 = vmatprep.subr.mxu0 0.0
        %469 = vmatpush1.msra.mxu0 %v343
        %470 = vmatprep.subr.mxu0 0.0
        %471 = vmatpush1.msra.mxu0 %v344
        %472 = vmatprep.subr.mxu0 0.0
        %473 = vmatpush1.msra.mxu0 %v345
        %474 = vmatprep.mubr.f32.mxu0 %v347
        %475 = vmatmul.mubr.f32.gmra.mrb[0].mxu0 %v346
        %v476 = vpop.f32.mrb[0].mxu0
        %v477 = vadd.f32 0.0, %v476
        %v478 = vpop.f32.mrb[0].mxu0
        %479 = vmatprep.mubr.f32.mxu0 %v349
        %480 = vmatmul.mubr.f32.gmra.mrb[0].mxu0 %v348
        %v481 = vpop.f32.mrb[0].mxu0
        %v482 = vadd.f32 0.0, %v481
        %v483 = vpop.f32.mrb[0].mxu0
        %484 = vmatprep.mubr.f32.mxu0 %v351
        %485 = vmatmul.mubr.f32.gmra.mrb[0].mxu0 %v350
        %v486 = vpop.f32.mrb[0].mxu0
        %v487 = vadd.f32 0.0, %v486
        %v488 = vpop.f32.mrb[0].mxu0
        %489 = vmatprep.mubr.f32.mxu0 %v353
        %490 = vmatmul.mubr.f32.gmra.mrb[0].mxu0 %v352
        %v491 = vpop.f32.mrb[0].mxu0
        %v492 = vadd.f32 0.0, %v491
        %v493 = vpop.f32.mrb[0].mxu0
        %494 = vmatprep.mubr.f32.mxu0 %v355
        %495 = vmatmul.mubr.f32.gmra.mrb[0].mxu0 %v354
        %v496 = vpop.f32.mrb[0].mxu0
        %v497 = vadd.f32 0.0, %v496
        %v498 = vpop.f32.mrb[0].mxu0
        %499 = vmatprep.mubr.f32.mxu0 %v357
        %500 = vmatmul.mubr.f32.gmra.mrb[0].mxu0 %v356
        %v501 = vpop.f32.mrb[0].mxu0
        %v502 = vadd.f32 0.0, %v501
        %v503 = vpop.f32.mrb[0].mxu0
        %504 = vmatprep.mubr.f32.mxu0 %v359
        %505 = vmatmul.mubr.f32.gmra.mrb[0].mxu0 %v358
        %v506 = vpop.f32.mrb[0].mxu0
        %v507 = vadd.f32 0.0, %v506
        %v508 = vpop.f32.mrb[0].mxu0
        %509 = vmatprep.mubr.f32.mxu0 %v361
        %510 = vmatmul.mubr.f32.gmra.mrb[0].mxu0 %v360
        %v511 = vpop.f32.mrb[0].mxu0
        %v512 = vadd.f32 0.0, %v511
        %v513 = vpop.f32.mrb[0].mxu0
        %514 = vmatprep.mubr.f32.mxu0 %v363
        %515 = vmatmul.mubr.f32.gmra.mrb[0].mxu0 %v362
        %v516 = vpop.f32.mrb[0].mxu0
        %v517 = vadd.f32 0.0, %v516
        %v518 = vpop.f32.mrb[0].mxu0
        %519 = vmatprep.mubr.f32.mxu0 %v365
        %520 = vmatmul.mubr.f32.gmra.mrb[0].mxu0 %v364
        %v521 = vpop.f32.mrb[0].mxu0
        %v522 = vadd.f32 0.0, %v521
        %v523 = vpop.f32.mrb[0].mxu0
        %524 = vmatprep.mubr.f32.mxu0 %v367
        %525 = vmatmul.mubr.f32.gmra.mrb[0].mxu0 %v366
        %v526 = vpop.f32.mrb[0].mxu0
        %v527 = vadd.f32 0.0, %v526
        %v528 = vpop.f32.mrb[0].mxu0
        %529 = vmatprep.mubr.f32.mxu0 %v369
        %530 = vmatmul.mubr.f32.gmra.mrb[0].mxu0 %v368
        %v531 = vpop.f32.mrb[0].mxu0
        %v532 = vadd.f32 0.0, %v531
        %v533 = vpop.f32.mrb[0].mxu0
        %534 = vmatprep.mubr.f32.mxu0 %v371
        %535 = vmatmul.mubr.f32.gmra.mrb[0].mxu0 %v370
        %v536 = vpop.f32.mrb[0].mxu0
        %v537 = vadd.f32 0.0, %v536
        %v538 = vpop.f32.mrb[0].mxu0
        %539 = vmatprep.mubr.f32.mxu0 %v373
        %540 = vmatmul.mubr.f32.gmra.mrb[0].mxu0 %v372
        %v541 = vpop.f32.mrb[0].mxu0
        %v542 = vadd.f32 0.0, %v541
        %v543 = vpop.f32.mrb[0].mxu0
        %544 = vmatprep.mubr.f32.mxu0 %v375
        %545 = vmatmul.mubr.f32.gmra.mrb[0].mxu0 %v374
        %v546 = vpop.f32.mrb[0].mxu0
        %v547 = vadd.f32 0.0, %v546
        %v548 = vpop.f32.mrb[0].mxu0
        %549 = vmatprep.mubr.f32.mxu0 %v377
        %550 = vmatmul.mubr.f32.gmra.mrb[0].mxu0 %v376
        %v551 = vpop.f32.mrb[0].mxu0
        %v552 = vadd.f32 0.0, %v551
        %v553 = vpop.f32.mrb[0].mxu0
        %554 = vmatprep.mubr.f32.mxu0 %v379
        %555 = vmatmul.mubr.f32.gmra.mrb[0].mxu0 %v378
        %v556 = vpop.f32.mrb[0].mxu0
        %v557 = vadd.f32 0.0, %v556
        %v558 = vpop.f32.mrb[0].mxu0
        %559 = vmatprep.mubr.f32.mxu0 %v381
        %560 = vmatmul.mubr.f32.gmra.mrb[0].mxu0 %v380
        %v561 = vpop.f32.mrb[0].mxu0
        %v562 = vadd.f32 0.0, %v561
        %v563 = vpop.f32.mrb[0].mxu0
        %564 = vmatprep.mubr.f32.mxu0 %v383
        %565 = vmatmul.mubr.f32.gmra.mrb[0].mxu0 %v382
        %v566 = vpop.f32.mrb[0].mxu0
        %v567 = vadd.f32 0.0, %v566
        %v568 = vpop.f32.mrb[0].mxu0
        %569 = vmatprep.mubr.f32.mxu0 %v385
        %570 = vmatmul.mubr.f32.gmra.mrb[0].mxu0 %v384
        %v571 = vpop.f32.mrb[0].mxu0
        %v572 = vadd.f32 0.0, %v571
        %v573 = vpop.f32.mrb[0].mxu0
        %574 = vmatprep.mubr.f32.mxu0 %v387
        %575 = vmatmul.mubr.f32.gmra.mrb[0].mxu0 %v386
        %v576 = vpop.f32.mrb[0].mxu0
        %v577 = vadd.f32 0.0, %v576
        %v578 = vpop.f32.mrb[0].mxu0
        %579 = vmatprep.mubr.f32.mxu0 %v389
        %580 = vmatmul.mubr.f32.gmra.mrb[0].mxu0 %v388
        %v581 = vpop.f32.mrb[0].mxu0
        %v582 = vadd.f32 0.0, %v581
        %v583 = vpop.f32.mrb[0].mxu0
        %584 = vmatprep.mubr.f32.mxu0 %v391
        %585 = vmatmul.mubr.f32.gmra.mrb[0].mxu0 %v390
        %v586 = vpop.f32.mrb[0].mxu0
        %v587 = vadd.f32 0.0, %v586
        %v588 = vpop.f32.mrb[0].mxu0
        %589 = vmatprep.mubr.f32.mxu0 %v393
        %590 = vmatmul.mubr.f32.gmra.mrb[0].mxu0 %v392
        %v591 = vpop.f32.mrb[0].mxu0
        %v592 = vadd.f32 0.0, %v591
        %v593 = vpop.f32.mrb[0].mxu0
        %594 = vmatprep.mubr.f32.mxu0 %v395
        %595 = vmatmul.mubr.f32.gmra.mrb[0].mxu0 %v394
        %v596 = vpop.f32.mrb[0].mxu0
        %v597 = vadd.f32 0.0, %v596
        %v598 = vpop.f32.mrb[0].mxu0
        %599 = vmatprep.mubr.f32.mxu0 %v397
        %600 = vmatmul.mubr.f32.gmra.mrb[0].mxu0 %v396
        %v601 = vpop.f32.mrb[0].mxu0
        %v602 = vadd.f32 0.0, %v601
        %v603 = vpop.f32.mrb[0].mxu0
        %604 = vmatprep.mubr.f32.mxu0 %v399
        %605 = vmatmul.mubr.f32.gmra.mrb[0].mxu0 %v398
        %v606 = vpop.f32.mrb[0].mxu0
        %v607 = vadd.f32 0.0, %v606
        %v608 = vpop.f32.mrb[0].mxu0
        %609 = vmatprep.mubr.f32.mxu0 %v401
        %610 = vmatmul.mubr.f32.gmra.mrb[0].mxu0 %v400
        %v611 = vpop.f32.mrb[0].mxu0
        %v612 = vadd.f32 0.0, %v611
        %v613 = vpop.f32.mrb[0].mxu0
        %614 = vmatprep.mubr.f32.mxu0 %v403
        %615 = vmatmul.mubr.f32.gmra.mrb[0].mxu0 %v402
        %v616 = vpop.f32.mrb[0].mxu0
        %v617 = vadd.f32 0.0, %v616
        %v618 = vpop.f32.mrb[0].mxu0
        %619 = vmatprep.mubr.f32.mxu0 %v405
        %620 = vmatmul.mubr.f32.gmra.mrb[0].mxu0 %v404
        %v621 = vpop.f32.mrb[0].mxu0
        %v622 = vadd.f32 0.0, %v621
        %v623 = vpop.f32.mrb[0].mxu0
        %624 = vmatprep.mubr.f32.mxu0 %v407
        %625 = vmatmul.mubr.f32.gmra.mrb[0].mxu0 %v406
        %v626 = vpop.f32.mrb[0].mxu0
        %v627 = vadd.f32 0.0, %v626
        %v628 = vpop.f32.mrb[0].mxu0
        %629 = vmatprep.mubr.f32.mxu0 %v409
        %630 = vmatmul.mubr.f32.gmra.mrb[0].mxu0 %v408
        %v631 = vpop.f32.mrb[0].mxu0
        %v632 = vadd.f32 0.0, %v631
        %v633 = vpop.f32.mrb[0].mxu0
        %634 = vdwg.mxu0
        %v635 = vld [vmem:[%s219] sm:$0xf]
        %v636 = vld [vmem:[%s219 + $0x4] sm:$0xf]
        %v637 = vld [vmem:[%s219 + $0x8] sm:$0xf]
        %v638 = vld [vmem:[%s219 + $0xc] sm:$0xf]
        %v639 = vld [vmem:[%s219 + $0x10] sm:$0xf]
        %v640 = vld [vmem:[%s219 + $0x14] sm:$0xf]
        %v641 = vld [vmem:[%s219 + $0x18] sm:$0xf]
        %v642 = vld [vmem:[%s219 + $0x1c] sm:$0xf]
        %v643 = vld [vmem:[%s219 + $0x20] sm:$0xf]
        %v644 = vld [vmem:[%s219 + $0x24] sm:$0xf]
        %v645 = vld [vmem:[%s219 + $0x28] sm:$0xf]
        %v646 = vld [vmem:[%s219 + $0x2c] sm:$0xf]
        %v647 = vld [vmem:[%s219 + $0x30] sm:$0xf]
        %v648 = vld [vmem:[%s219 + $0x34] sm:$0xf]
        %v649 = vld [vmem:[%s219 + $0x38] sm:$0xf]
        %v650 = vld [vmem:[%s219 + $0x3c] sm:$0xf]
        %v651 = vld [vmem:[%s244] sm:$0x1]
        %v653 = vlaneseq
        %v654 = vshrl.u32 %v653, 7
        %v655 = vsub.s32 0, %v654
        %v656 = vrot.slane %v651, %v655
        %v674 = vunpack.c.l.b16 %v635
        %v675 = vunpack.c.l.b16 %v636
        %v676 = vunpack.c.l.b16 %v637
        %v677 = vunpack.c.l.b16 %v638
        %v678 = vunpack.c.l.b16 %v639
        %v679 = vunpack.c.l.b16 %v640
        %v680 = vunpack.c.l.b16 %v641
        %v681 = vunpack.c.l.b16 %v642
        %v682 = vunpack.c.l.b16 %v643
        %v683 = vunpack.c.l.b16 %v644
        %v684 = vunpack.c.l.b16 %v645
        %v685 = vunpack.c.l.b16 %v646
        %v686 = vunpack.c.l.b16 %v647
        %v687 = vunpack.c.l.b16 %v648
        %v688 = vunpack.c.l.b16 %v649
        %v689 = vunpack.c.l.b16 %v650
        %v690 = vpack.c.b16 %v675, %v674
        %v691 = vpack.c.b16 %v677, %v676
        %v692 = vpack.c.b16 %v679, %v678
        %v693 = vpack.c.b16 %v681, %v680
        %v694 = vpack.c.b16 %v683, %v682
        %v695 = vpack.c.b16 %v685, %v684
        %v696 = vpack.c.b16 %v687, %v686
        %v697 = vpack.c.b16 %v689, %v688
        %706 = vmatprep.subr.bf16.mxu0 0
        %707 = vmatpush1.bf16.msra.mxu0 %v690
        %708 = vmatprep.subr.bf16.mxu0 0
        %709 = vmatpush1.bf16.msra.mxu0 %v691
        %710 = vmatprep.subr.bf16.mxu0 0
        %711 = vmatpush1.bf16.msra.mxu0 %v692
        %712 = vmatprep.subr.bf16.mxu0 0
        %713 = vmatpush1.bf16.msra.mxu0 %v693
        %714 = vmatprep.subr.bf16.mxu0 0
        %715 = vmatpush1.bf16.msra.mxu0 %v694
        %716 = vmatprep.subr.bf16.mxu0 0
        %717 = vmatpush1.bf16.msra.mxu0 %v695
        %718 = vmatprep.subr.bf16.mxu0 0
        %719 = vmatpush1.bf16.msra.mxu0 %v696
        %720 = vmatprep.subr.bf16.mxu0 0
        %721 = vmatpush1.bf16.msra.mxu0 %v697
        %722 = vmatprep.subr.bf16.mxu0 0
        %723 = vmatpush1.bf16.msra.mxu0 0
        %724 = vmatprep.subr.bf16.mxu0 0
        %725 = vmatpush1.bf16.msra.mxu0 0
        %726 = vmatprep.subr.bf16.mxu0 0
        %727 = vmatpush1.bf16.msra.mxu0 0
        %728 = vmatprep.subr.bf16.mxu0 0
        %729 = vmatpush1.bf16.msra.mxu0 0
        %730 = vmatprep.subr.bf16.mxu0 0
        %731 = vmatpush1.bf16.msra.mxu0 0
        %732 = vmatprep.subr.bf16.mxu0 0
        %733 = vmatpush1.bf16.msra.mxu0 0
        %734 = vmatprep.subr.bf16.mxu0 0
        %735 = vmatpush1.bf16.msra.mxu0 0
        %736 = vmatprep.subr.bf16.mxu0 0
        %737 = vmatpush1.bf16.msra.mxu0 0
        %738 = vmatprep.mubr.f32.mxu0 0.0
        %739 = vmatmul.mubr.f32.gmra.mrb[0].mxu0 %v477
        %v740 = vpop.f32.mrb[0].mxu0
        %v741 = vadd.f32 %v656, %v740
        %v742 = vpop.f32.mrb[0].mxu0
        %743 = vmatprep.mubr.f32.mxu0 0.0
        %744 = vmatmul.mubr.f32.gmra.mrb[0].mxu0 %v482
        %v745 = vpop.f32.mrb[0].mxu0
        %v746 = vadd.f32 %v656, %v745
        %v747 = vpop.f32.mrb[0].mxu0
        %748 = vmatprep.mubr.f32.mxu0 0.0
        %749 = vmatmul.mubr.f32.gmra.mrb[0].mxu0 %v487
        %v750 = vpop.f32.mrb[0].mxu0
        %v751 = vadd.f32 %v656, %v750
        %v752 = vpop.f32.mrb[0].mxu0
        %753 = vmatprep.mubr.f32.mxu0 0.0
        %754 = vmatmul.mubr.f32.gmra.mrb[0].mxu0 %v492
        %v755 = vpop.f32.mrb[0].mxu0
        %v756 = vadd.f32 %v656, %v755
        %v757 = vpop.f32.mrb[0].mxu0
        %758 = vmatprep.mubr.f32.mxu0 0.0
        %759 = vmatmul.mubr.f32.gmra.mrb[0].mxu0 %v497
        %v760 = vpop.f32.mrb[0].mxu0
        %v761 = vadd.f32 %v656, %v760
        %v762 = vpop.f32.mrb[0].mxu0
        %763 = vmatprep.mubr.f32.mxu0 0.0
        %764 = vmatmul.mubr.f32.gmra.mrb[0].mxu0 %v502
        %v765 = vpop.f32.mrb[0].mxu0
        %v766 = vadd.f32 %v656, %v765
        %v767 = vpop.f32.mrb[0].mxu0
        %768 = vmatprep.mubr.f32.mxu0 0.0
        %769 = vmatmul.mubr.f32.gmra.mrb[0].mxu0 %v507
        %v770 = vpop.f32.mrb[0].mxu0
        %v771 = vadd.f32 %v656, %v770
        %v772 = vpop.f32.mrb[0].mxu0
        %773 = vmatprep.mubr.f32.mxu0 0.0
        %774 = vmatmul.mubr.f32.gmra.mrb[0].mxu0 %v512
        %v775 = vpop.f32.mrb[0].mxu0
        %v776 = vadd.f32 %v656, %v775
        %v777 = vpop.f32.mrb[0].mxu0
        %778 = vmatprep.mubr.f32.mxu0 0.0
        %779 = vmatmul.mubr.f32.gmra.mrb[0].mxu0 %v517
        %v780 = vpop.f32.mrb[0].mxu0
        %v781 = vadd.f32 %v656, %v780
        %v782 = vpop.f32.mrb[0].mxu0
        %783 = vmatprep.mubr.f32.mxu0 0.0
        %784 = vmatmul.mubr.f32.gmra.mrb[0].mxu0 %v522
        %v785 = vpop.f32.mrb[0].mxu0
        %v786 = vadd.f32 %v656, %v785
        %v787 = vpop.f32.mrb[0].mxu0
        %788 = vmatprep.mubr.f32.mxu0 0.0
        %789 = vmatmul.mubr.f32.gmra.mrb[0].mxu0 %v527
        %v790 = vpop.f32.mrb[0].mxu0
        %v791 = vadd.f32 %v656, %v790
        %v792 = vpop.f32.mrb[0].mxu0
        %793 = vmatprep.mubr.f32.mxu0 0.0
        %794 = vmatmul.mubr.f32.gmra.mrb[0].mxu0 %v532
        %v795 = vpop.f32.mrb[0].mxu0
        %v796 = vadd.f32 %v656, %v795
        %v797 = vpop.f32.mrb[0].mxu0
        %798 = vmatprep.mubr.f32.mxu0 0.0
        %799 = vmatmul.mubr.f32.gmra.mrb[0].mxu0 %v537
        %v800 = vpop.f32.mrb[0].mxu0
        %v801 = vadd.f32 %v656, %v800
        %v802 = vpop.f32.mrb[0].mxu0
        %803 = vmatprep.mubr.f32.mxu0 0.0
        %804 = vmatmul.mubr.f32.gmra.mrb[0].mxu0 %v542
        %v805 = vpop.f32.mrb[0].mxu0
        %v806 = vadd.f32 %v656, %v805
        %v807 = vpop.f32.mrb[0].mxu0
        %808 = vmatprep.mubr.f32.mxu0 0.0
        %809 = vmatmul.mubr.f32.gmra.mrb[0].mxu0 %v547
        %v810 = vpop.f32.mrb[0].mxu0
        %v811 = vadd.f32 %v656, %v810
        %v812 = vpop.f32.mrb[0].mxu0
        %813 = vmatprep.mubr.f32.mxu0 0.0
        %814 = vmatmul.mubr.f32.gmra.mrb[0].mxu0 %v552
        %v815 = vpop.f32.mrb[0].mxu0
        %v816 = vadd.f32 %v656, %v815
        %v817 = vpop.f32.mrb[0].mxu0
        %818 = vmatprep.mubr.f32.mxu0 0.0
        %819 = vmatmul.mubr.f32.gmra.mrb[0].mxu0 %v557
        %v820 = vpop.f32.mrb[0].mxu0
        %v821 = vadd.f32 %v656, %v820
        %v822 = vpop.f32.mrb[0].mxu0
        %823 = vmatprep.mubr.f32.mxu0 0.0
        %824 = vmatmul.mubr.f32.gmra.mrb[0].mxu0 %v562
        %v825 = vpop.f32.mrb[0].mxu0
        %v826 = vadd.f32 %v656, %v825
        %v827 = vpop.f32.mrb[0].mxu0
        %828 = vmatprep.mubr.f32.mxu0 0.0
        %829 = vmatmul.mubr.f32.gmra.mrb[0].mxu0 %v567
        %v830 = vpop.f32.mrb[0].mxu0
        %v831 = vadd.f32 %v656, %v830
        %v832 = vpop.f32.mrb[0].mxu0
        %833 = vmatprep.mubr.f32.mxu0 0.0
        %834 = vmatmul.mubr.f32.gmra.mrb[0].mxu0 %v572
        %v835 = vpop.f32.mrb[0].mxu0
        %v836 = vadd.f32 %v656, %v835
        %v837 = vpop.f32.mrb[0].mxu0
        %838 = vmatprep.mubr.f32.mxu0 0.0
        %839 = vmatmul.mubr.f32.gmra.mrb[0].mxu0 %v577
        %v840 = vpop.f32.mrb[0].mxu0
        %v841 = vadd.f32 %v656, %v840
        %v842 = vpop.f32.mrb[0].mxu0
        %843 = vmatprep.mubr.f32.mxu0 0.0
        %844 = vmatmul.mubr.f32.gmra.mrb[0].mxu0 %v582
        %v845 = vpop.f32.mrb[0].mxu0
        %v846 = vadd.f32 %v656, %v845
        %v847 = vpop.f32.mrb[0].mxu0
        %848 = vmatprep.mubr.f32.mxu0 0.0
        %849 = vmatmul.mubr.f32.gmra.mrb[0].mxu0 %v587
        %v850 = vpop.f32.mrb[0].mxu0
        %v851 = vadd.f32 %v656, %v850
        %v852 = vpop.f32.mrb[0].mxu0
        %853 = vmatprep.mubr.f32.mxu0 0.0
        %854 = vmatmul.mubr.f32.gmra.mrb[0].mxu0 %v592
        %v855 = vpop.f32.mrb[0].mxu0
        %v856 = vadd.f32 %v656, %v855
        %v857 = vpop.f32.mrb[0].mxu0
        %858 = vmatprep.mubr.f32.mxu0 0.0
        %859 = vmatmul.mubr.f32.gmra.mrb[0].mxu0 %v597
        %v860 = vpop.f32.mrb[0].mxu0
        %v861 = vadd.f32 %v656, %v860
        %v862 = vpop.f32.mrb[0].mxu0
        %863 = vmatprep.mubr.f32.mxu0 0.0
        %864 = vmatmul.mubr.f32.gmra.mrb[0].mxu0 %v602
        %v865 = vpop.f32.mrb[0].mxu0
        %v866 = vadd.f32 %v656, %v865
        %v867 = vpop.f32.mrb[0].mxu0
        %868 = vmatprep.mubr.f32.mxu0 0.0
        %869 = vmatmul.mubr.f32.gmra.mrb[0].mxu0 %v607
        %v870 = vpop.f32.mrb[0].mxu0
        %v871 = vadd.f32 %v656, %v870
        %v872 = vpop.f32.mrb[0].mxu0
        %873 = vmatprep.mubr.f32.mxu0 0.0
        %874 = vmatmul.mubr.f32.gmra.mrb[0].mxu0 %v612
        %v875 = vpop.f32.mrb[0].mxu0
        %v876 = vadd.f32 %v656, %v875
        %v877 = vpop.f32.mrb[0].mxu0
        %878 = vmatprep.mubr.f32.mxu0 0.0
        %879 = vmatmul.mubr.f32.gmra.mrb[0].mxu0 %v617
        %v880 = vpop.f32.mrb[0].mxu0
        %v881 = vadd.f32 %v656, %v880
        %v882 = vpop.f32.mrb[0].mxu0
        %883 = vmatprep.mubr.f32.mxu0 0.0
        %884 = vmatmul.mubr.f32.gmra.mrb[0].mxu0 %v622
        %v885 = vpop.f32.mrb[0].mxu0
        %v886 = vadd.f32 %v656, %v885
        %v887 = vpop.f32.mrb[0].mxu0
        %888 = vmatprep.mubr.f32.mxu0 0.0
        %889 = vmatmul.mubr.f32.gmra.mrb[0].mxu0 %v627
        %v890 = vpop.f32.mrb[0].mxu0
        %v891 = vadd.f32 %v656, %v890
        %v892 = vpop.f32.mrb[0].mxu0
        %893 = vmatprep.mubr.f32.mxu0 0.0
        %894 = vmatmul.mubr.f32.gmra.mrb[0].mxu0 %v632
        %v895 = vpop.f32.mrb[0].mxu0
        %v896 = vadd.f32 %v656, %v895
        %v897 = vpop.f32.mrb[0].mxu0
        %898 = vdwg.mxu0
        %v899 = vmax.f32 %v741, 0.0
        %v900 = vmax.f32 %v746, 0.0
        %v901 = vmax.f32 %v751, 0.0
        %v902 = vmax.f32 %v756, 0.0
        %v903 = vmax.f32 %v761, 0.0
        %v904 = vmax.f32 %v766, 0.0
        %v905 = vmax.f32 %v771, 0.0
        %v906 = vmax.f32 %v776, 0.0
        %v907 = vmax.f32 %v781, 0.0
        %v908 = vmax.f32 %v786, 0.0
        %v909 = vmax.f32 %v791, 0.0
        %v910 = vmax.f32 %v796, 0.0
        %v911 = vmax.f32 %v801, 0.0
        %v912 = vmax.f32 %v806, 0.0
        %v913 = vmax.f32 %v811, 0.0
        %v914 = vmax.f32 %v816, 0.0
        %v915 = vmax.f32 %v821, 0.0
        %v916 = vmax.f32 %v826, 0.0
        %v917 = vmax.f32 %v831, 0.0
        %v918 = vmax.f32 %v836, 0.0
        %v919 = vmax.f32 %v841, 0.0
        %v920 = vmax.f32 %v846, 0.0
        %v921 = vmax.f32 %v851, 0.0
        %v922 = vmax.f32 %v856, 0.0
        %v923 = vmax.f32 %v861, 0.0
        %v924 = vmax.f32 %v866, 0.0
        %v925 = vmax.f32 %v871, 0.0
        %v926 = vmax.f32 %v876, 0.0
        %v927 = vmax.f32 %v881, 0.0
        %v928 = vmax.f32 %v886, 0.0
        %v929 = vmax.f32 %v891, 0.0
        %v930 = vmax.f32 %v896, 0.0
        %931 = vst [vmem:[#allocation2] sm:$0xff] %v899
        %932 = vst [vmem:[#allocation2 + $0x8] sm:$0xff] %v900
        %933 = vst [vmem:[#allocation2 + $0x10] sm:$0xff] %v901
        %934 = vst [vmem:[#allocation2 + $0x18] sm:$0xff] %v902
        %935 = vst [vmem:[#allocation2 + $0x20] sm:$0xff] %v903
        %936 = vst [vmem:[#allocation2 + $0x28] sm:$0xff] %v904
        %937 = vst [vmem:[#allocation2 + $0x30] sm:$0xff] %v905
        %938 = vst [vmem:[#allocation2 + $0x38] sm:$0xff] %v906
        %939 = vst [vmem:[#allocation2 + $0x40] sm:$0xff] %v907
        %940 = vst [vmem:[#allocation2 + $0x48] sm:$0xff] %v908
        %941 = vst [vmem:[#allocation2 + $0x50] sm:$0xff] %v909
        %942 = vst [vmem:[#allocation2 + $0x58] sm:$0xff] %v910
        %943 = vst [vmem:[#allocation2 + $0x60] sm:$0xff] %v911
        %944 = vst [vmem:[#allocation2 + $0x68] sm:$0xff] %v912
        %945 = vst [vmem:[#allocation2 + $0x70] sm:$0xff] %v913
        %946 = vst [vmem:[#allocation2 + $0x78] sm:$0xff] %v914
        %947 = vst [vmem:[#allocation2 + $0x80] sm:$0xff] %v915
        %948 = vst [vmem:[#allocation2 + $0x88] sm:$0xff] %v916
        %949 = vst [vmem:[#allocation2 + $0x90] sm:$0xff] %v917
        %950 = vst [vmem:[#allocation2 + $0x98] sm:$0xff] %v918
        %951 = vst [vmem:[#allocation2 + $0xa0] sm:$0xff] %v919
        %952 = vst [vmem:[#allocation2 + $0xa8] sm:$0xff] %v920
        %953 = vst [vmem:[#allocation2 + $0xb0] sm:$0xff] %v921
        %954 = vst [vmem:[#allocation2 + $0xb8] sm:$0xff] %v922
        %955 = vst [vmem:[#allocation2 + $0xc0] sm:$0xff] %v923
        %956 = vst [vmem:[#allocation2 + $0xc8] sm:$0xff] %v924
        %957 = vst [vmem:[#allocation2 + $0xd0] sm:$0xff] %v925
        %958 = vst [vmem:[#allocation2 + $0xd8] sm:$0xff] %v926
        %959 = vst [vmem:[#allocation2 + $0xe0] sm:$0xff] %v927
        %960 = vst [vmem:[#allocation2 + $0xe8] sm:$0xff] %v928
        %961 = vst [vmem:[#allocation2 + $0xf0] sm:$0xff] %v929
        %962 = vst [vmem:[#allocation2 + $0xf8] sm:$0xff] %v930
        %963 = vst [vmem:[#allocation9] sm:$0xff] %v899
        %964 = vst [vmem:[#allocation9 + $0x8] sm:$0xff] %v900
        %965 = vst [vmem:[#allocation9 + $0x10] sm:$0xff] %v901
        %966 = vst [vmem:[#allocation9 + $0x18] sm:$0xff] %v902
        %967 = vst [vmem:[#allocation9 + $0x20] sm:$0xff] %v903
        %968 = vst [vmem:[#allocation9 + $0x28] sm:$0xff] %v904
        %969 = vst [vmem:[#allocation9 + $0x30] sm:$0xff] %v905
        %970 = vst [vmem:[#allocation9 + $0x38] sm:$0xff] %v906
        %971 = vst [vmem:[#allocation9 + $0x40] sm:$0xff] %v907
        %972 = vst [vmem:[#allocation9 + $0x48] sm:$0xff] %v908
        %973 = vst [vmem:[#allocation9 + $0x50] sm:$0xff] %v909
        %974 = vst [vmem:[#allocation9 + $0x58] sm:$0xff] %v910
        %975 = vst [vmem:[#allocation9 + $0x60] sm:$0xff] %v911
        %976 = vst [vmem:[#allocation9 + $0x68] sm:$0xff] %v912
        %977 = vst [vmem:[#allocation9 + $0x70] sm:$0xff] %v913
        %978 = vst [vmem:[#allocation9 + $0x78] sm:$0xff] %v914
        %979 = vst [vmem:[#allocation9 + $0x80] sm:$0xff] %v915
        %980 = vst [vmem:[#allocation9 + $0x88] sm:$0xff] %v916
        %981 = vst [vmem:[#allocation9 + $0x90] sm:$0xff] %v917
        %982 = vst [vmem:[#allocation9 + $0x98] sm:$0xff] %v918
        %983 = vst [vmem:[#allocation9 + $0xa0] sm:$0xff] %v919
        %984 = vst [vmem:[#allocation9 + $0xa8] sm:$0xff] %v920
        %985 = vst [vmem:[#allocation9 + $0xb0] sm:$0xff] %v921
        %986 = vst [vmem:[#allocation9 + $0xb8] sm:$0xff] %v922
        %987 = vst [vmem:[#allocation9 + $0xc0] sm:$0xff] %v923
        %988 = vst [vmem:[#allocation9 + $0xc8] sm:$0xff] %v924
        %989 = vst [vmem:[#allocation9 + $0xd0] sm:$0xff] %v925
        %990 = vst [vmem:[#allocation9 + $0xd8] sm:$0xff] %v926
        %991 = vst [vmem:[#allocation9 + $0xe0] sm:$0xff] %v927
        %992 = vst [vmem:[#allocation9 + $0xe8] sm:$0xff] %v928
        %993 = vst [vmem:[#allocation9 + $0xf0] sm:$0xff] %v929
        %994 = vst [vmem:[#allocation9 + $0xf8] sm:$0xff] %v930
        // Predicated region
        $region53: #{tpu_custom_call.1} parent=35 // pred_check
          %p995 = pneg %p125
        $region54: #{tpu_custom_call.1} parent=35 // pred_check_branch
          %997 = sbr.rel (%p995) target = $region56
        $region55: #{tpu_custom_call.1} parent=35 // pred_region
          %s999 = ssub.s32 4096, 4096
          %1000 = vsyncadd [#allocation5], %s999
          %s1001 = sshll.u32 [#allocation9], 4
          %s1002 = int_to_ptr.vmem [resolvable:$true] %s1001
          %1007 = dma.vmem_to_hbm [thread:$0]  %s1002, 4096, %s4, [#allocation5], 128, 128, 8
        $region56: #{tpu_custom_call.1} parent=35 // pred_fallthru
          _
        // Predicated region
        $region57: #{tpu_custom_call.1} parent=35 // pred_check
          %p1008 = pneg %p125
        $region58: #{tpu_custom_call.1} parent=35 // pred_check_branch
          %1010 = sbr.rel (%p1008) target = $region60
        $region59: #{tpu_custom_call.1} parent=35 // pred_region
          %1011 = dma.done [#allocation5], 4096
        $region60: #{tpu_custom_call.1} parent=35 // pred_fallthru
          _
      $region36: #{tpu_custom_call.1} parent=5 // pred_fallthru
        _
      %p1012 = scmp.le.s32.totalorder 2, %s13
      // Predicated region
      $region61: #{tpu_custom_call.1} parent=5 // pred_check
        %p1013 = pneg %p1012
      $region62: #{tpu_custom_call.1} parent=5 // pred_check_branch
        %1015 = sbr.rel (%p1013) target = $region64
      $region63: #{tpu_custom_call.1} parent=5 // pred_region
        %s1016 = ssub.s32 %s13, 2
      $region64: #{tpu_custom_call.1} parent=5 // pred_fallthru
        _
    $region6: #{tpu_custom_call.1} parent=1 // loop_footer
      %s17 = sadd.s32 1, %s13
    $region7: #{tpu_custom_call.1} parent=1 // loop_footer_branch
      %12 = sbr.rel target = $region3
    $region8: #{tpu_custom_call.1} parent=1 // loop_exit
      _
    %1017 = vsyncpa [#allocation4], 1
    %s1018 = scalar_lea.sflag [#allocation4], 1
    %1019 = vsyncpa %s1018, 1
    %1020 = vsyncpa [#allocation7], 1
    %1021 = vsyncpa [#allocation5], 1
    %s1022 = scalar_lea.sflag [#allocation5], 1
    %1023 = vsyncpa %s1022, 1

</llo_original>
